<compile_context>
chip_gen: v6e
topology: v6e:2x2x1
jax: 0.10.0
libtpu: 0.0.40
codegen_flags: <defaults>
</compile_context>

<pallas_src>
import functools

import jax
import jax.numpy as jnp
from jax.experimental import pallas as pl
from jax.experimental.pallas import tpu as pltpu


def _round_up(x, m):
    return ((x + m - 1) // m) * m


def _mlp_kernel(x_ref, w1_ref, w2_ref, w3_ref, w4_ref, b_ref, o_ref,
                *, d1, d2, d3, d4):
    cdt = w1_ref.dtype                      # compute dtype of the MXU operands
    x = x_ref[...].astype(cdt)
    # Layer 1: Linear + ReLU (accumulate f32)
    h = jnp.dot(x, w1_ref[...],
                preferred_element_type=jnp.float32) + b_ref[0:1, :d1]
    h = jnp.maximum(h, 0.0)
    # Layer 2: Linear + ReLU
    h = jnp.dot(h.astype(cdt), w2_ref[...],
                preferred_element_type=jnp.float32) + b_ref[1:2, :d2]
    h = jnp.maximum(h, 0.0)
    # Layer 3: Linear + ReLU
    h = jnp.dot(h.astype(cdt), w3_ref[...],
                preferred_element_type=jnp.float32) + b_ref[2:3, :d3]
    h = jnp.maximum(h, 0.0)
    # Layer 4: Linear (Sequential ends with Linear, no activation)
    o_ref[...] = (jnp.dot(h.astype(cdt), w4_ref[...],
                          preferred_element_type=jnp.float32)
                  + b_ref[3:4, :d4]).astype(o_ref.dtype)


@functools.partial(jax.jit, static_argnames=("n_action", "batch_tile"))
def more_layers_network_forward(state, padded, n_action, batch_tile=1024):
    """Fused forward pass.

    state:   (B, input_dim) float32, unpadded
    padded:  dict from prepare_params(): w1 (input_dim, d1p), w2..w4 padded to
             128 multiples, 'b' = stacked f32 biases (4, Fmax)
    returns: (B, n_action) float32
    """
    w1, w2, w3, w4, b = (padded["w1"], padded["w2"], padded["w3"],
                         padded["w4"], padded["b"])
    B, in_dim = state.shape
    d0 = w1.shape[0]
    d1, d2, d3, d4 = w1.shape[1], w2.shape[1], w3.shape[1], w4.shape[1]

    # Only pad batch rows when B is not 8-aligned (rare; tiny). No lane padding
    # of the input dim — BlockSpec last dim may equal the full array dim.
    B8 = _round_up(B, 8)
    if B8 != B or d0 != in_dim:
        x = jnp.zeros((B8, d0), state.dtype).at[:B, :in_dim].set(state)
    else:
        x = state  # common case: zero host-side padding work

    # Batch tile: as large as possible to amortize per-step overhead, but capped
    # so >= 2 grid steps remain when B permits (both v7x TCs get work).
    if B8 > 8:
        tb = min(batch_tile, _round_up(pl.cdiv(B8, 2), 8))
    else:
        tb = B8
    grid = (pl.cdiv(B8, tb),)

    kernel = functools.partial(_mlp_kernel, d1=d1, d2=d2, d3=d3, d4=d4)

    out = pl.pallas_call(
        kernel,
        out_shape=jax.ShapeDtypeStruct((B8, d4), jnp.float32),
        grid=grid,
        in_specs=[
            pl.BlockSpec((tb, d0), lambda i: (i, 0)),      # state tile (edge block masked)
            pl.BlockSpec(w1.shape, lambda i: (0, 0)),      # resident weights
            pl.BlockSpec(w2.shape, lambda i: (0, 0)),
            pl.BlockSpec(w3.shape, lambda i: (0, 0)),
            pl.BlockSpec(w4.shape, lambda i: (0, 0)),
            pl.BlockSpec(b.shape, lambda i: (0, 0)),       # stacked f32 biases
        ],
        out_specs=pl.BlockSpec((tb, d4), lambda i: (i, 0)),
        compiler_params=pltpu.CompilerParams(
            dimension_semantics=("parallel",)),
    )(x, w1, w2, w3, w4, b)

    return out[:B, :n_action]


def init_params(key, input_dim, fc1_dim, fc2_dim, fc3_dim, n_action):
    """PyTorch nn.Linear default init: U(-1/sqrt(fan_in), 1/sqrt(fan_in))."""
    dims = [(input_dim, fc1_dim), (fc1_dim, fc2_dim),
            (fc2_dim, fc3_dim), (fc3_dim, n_action)]
    params = {}
    keys = jax.random.split(key, 2 * len(dims))
    for li, (fan_in, fan_out) in enumerate(dims, start=1):
        bound = 1.0 / (fan_in ** 0.5)
        params[f"w{li}"] = jax.random.uniform(
            keys[2 * (li - 1)], (fan_in, fan_out),
            minval=-bound, maxval=bound, dtype=jnp.float32)
        params[f"b{li}"] = jax.random.uniform(
            keys[2 * (li - 1) + 1], (1, fan_out),
            minval=-bound, maxval=bound, dtype=jnp.float32)
    return params


def prepare_params(params, weight_dtype=jnp.float32):
    """One-time padding of weights + bias stacking.

    w1 keeps its natural fan_in (the contraction dim needs no 128 padding);
    all output dims (and fan_in of w2..w4, which equal the previous output dim)
    are zero-padded to multiples of 128 so stores stay lane-dense.
    Weights are stored in `weight_dtype` (use jnp.bfloat16 on v6e/v7x to halve
    DMA and hit the native MXU path); biases stay f32 (added to f32 accum).
    """
    padded = {}
    out_pads = []
    for li in range(1, 5):
        w = params[f"w{li}"]
        fan_in, fan_out = w.shape
        pin = fan_in if li == 1 else _round_up(fan_in, 128)
        pout = _round_up(fan_out, 128)
        out_pads.append(pout)
        padded[f"w{li}"] = (jnp.zeros((pin, pout), weight_dtype)
                            .at[:fan_in, :fan_out].set(w.astype(weight_dtype)))
    fmax = max(out_pads)
    b = jnp.zeros((4, fmax), jnp.float32)
    for li in range(1, 5):
        brow = params[f"b{li}"][0]
        b = b.at[li - 1, :brow.shape[0]].set(brow)
    padded["b"] = b
    return padded


def _reference_forward(state, params):
    h = jnp.maximum(state @ params["w1"] + params["b1"], 0.0)
    h = jnp.maximum(h @ params["w2"] + params["b2"], 0.0)
    h = jnp.maximum(h @ params["w3"] + params["b3"], 0.0)
    return h @ params["w4"] + params["b4"]


if __name__ == "__main__":
    # Small shapes implied by forward(): state is (batch, input_dim).
    batch, input_dim = 8, 32
    fc1_dim, fc2_dim, fc3_dim = 64, 48, 32
    fc4_dim = 16   # present in __init__ but unused by the network; kept for parity
    n_action = 8

    key = jax.random.PRNGKey(0)
    k_state, k_params, k_big, k_odd = jax.random.split(key, 4)
    state = jax.random.normal(k_state, (batch, input_dim), dtype=jnp.float32)
    params = init_params(k_params, input_dim, fc1_dim, fc2_dim, fc3_dim, n_action)

    # ---- f32 weights: exact parity with the reference ----
    padded_f32 = prepare_params(params, weight_dtype=jnp.float32)

    # Tiny-batch path (single block, grid of 1, no host padding).
    actions = more_layers_network_forward(state, padded_f32, n_action)
    actions = jax.block_until_ready(actions)
    ref = _reference_forward(state, params)
    assert actions.shape == (batch, n_action)
    assert jnp.allclose(actions, ref, atol=1e-4, rtol=1e-4), "tiny-batch mismatch"

    # Larger batch: tile capped to keep 2 parallel grid steps (512 -> 2 x 256).
    big_state = jax.random.normal(k_big, (512, input_dim), dtype=jnp.float32)
    big_actions = more_layers_network_forward(big_state, padded_f32, n_action)
    big_actions = jax.block_until_ready(big_actions)
    big_ref = _reference_forward(big_state, params)
    assert big_actions.shape == (512, n_action)
    assert jnp.allclose(big_actions, big_ref, atol=1e-4, rtol=1e-4), "big mismatch"

    # Uneven batch: exercises the cdiv-grid / masked edge-block path (no pad pass).
    odd_state = jax.random.normal(k_odd, (200, input_dim), dtype=jnp.float32)
    odd_actions = more_layers_network_forward(odd_state, padded_f32, n_action)
    odd_actions = jax.block_until_ready(odd_actions)
    odd_ref = _reference_forward(odd_state, params)
    assert odd_actions.shape == (200, n_action)
    assert jnp.allclose(odd_actions, odd_ref, atol=1e-4, rtol=1e-4), "odd mismatch"

    # ---- bf16 weights (v6e/v7x fast path): f32 accumulation, looser tolerance ----
    padded_bf16 = prepare_params(params, weight_dtype=jnp.bfloat16)
    bf16_actions = more_layers_network_forward(big_state, padded_bf16, n_action)
    bf16_actions = jax.block_until_ready(bf16_actions)
    assert bf16_actions.shape == (512, n_action)
    assert jnp.allclose(bf16_actions, big_ref, atol=5e-2, rtol=5e-2), "bf16 mismatch"

    # TODO(synk): Adagrad optimizer / lr / loss from __init__ are training-time
    # state and are not part of forward(); not implemented here.
    print("KERNEL_OK")
</pallas_src>

<mosaic_0001>
module attributes {stable_mosaic.version = 11 : i64} {
  func.func @_mlp_kernel(%arg0: i32, %arg1: memref<8x32xf32, #tpu.memory_space<vmem>>, %arg2: memref<32x128xf32, #tpu.memory_space<vmem>>, %arg3: memref<128x128xf32, #tpu.memory_space<vmem>>, %arg4: memref<128x128xf32, #tpu.memory_space<vmem>>, %arg5: memref<128x128xf32, #tpu.memory_space<vmem>>, %arg6: memref<4x128xf32, #tpu.memory_space<vmem>>, %arg7: memref<8x128xf32, #tpu.memory_space<vmem>>) attributes {dimension_semantics = [#tpu.dimension_semantics<parallel>], iteration_bounds = array<i64: 1>, scalar_prefetch = 0 : i64, scratch_operands = 0 : i64, tpu.core_type = #tpu.core_type<tc>, window_params = [{transform_indices = @transform_0, window_bounds = array<i64: 8, 32>}, {pipeline_mode = #tpu.pipeline_mode<synchronous>, transform_indices = @transform_1, window_bounds = array<i64: 32, 128>}, {pipeline_mode = #tpu.pipeline_mode<synchronous>, transform_indices = @transform_2, window_bounds = array<i64: 128, 128>}, {pipeline_mode = #tpu.pipeline_mode<synchronous>, transform_indices = @transform_3, window_bounds = array<i64: 128, 128>}, {pipeline_mode = #tpu.pipeline_mode<synchronous>, transform_indices = @transform_4, window_bounds = array<i64: 128, 128>}, {pipeline_mode = #tpu.pipeline_mode<synchronous>, transform_indices = @transform_5, window_bounds = array<i64: 4, 128>}, {transform_indices = @transform_6, window_bounds = array<i64: 8, 128>}]} {
    %c0 = arith.constant 0 : index
    %c0_0 = arith.constant 0 : index
    %0 = vector.load %arg1[%c0, %c0_0] : memref<8x32xf32, #tpu.memory_space<vmem>>, vector<8x32xf32>
    %c0_1 = arith.constant 0 : index
    %c0_2 = arith.constant 0 : index
    %1 = vector.load %arg2[%c0_1, %c0_2] : memref<32x128xf32, #tpu.memory_space<vmem>>, vector<32x128xf32>
    %cst = arith.constant dense<0.000000e+00> : vector<8x128xf32>
    %2 = tpu.matmul %0, %1, %cst {dimension_numbers = #tpu.dot_dimension_numbers<[1], [0], [0], [1], [0, 0, 1, 1], [], []>} : vector<8x32xf32>, vector<32x128xf32>, vector<8x128xf32> -> vector<8x128xf32>
    %c0_3 = arith.constant 0 : index
    %c0_4 = arith.constant 0 : index
    %3 = vector.load %arg6[%c0_3, %c0_4] : memref<4x128xf32, #tpu.memory_space<vmem>>, vector<1x128xf32>
    %4 = vector.broadcast %3 : vector<1x128xf32> to vector<8x128xf32>
    %5 = arith.addf %2, %4 : vector<8x128xf32>
    %cst_5 = arith.constant 0.000000e+00 : f32
    %6 = vector.broadcast %cst_5 : f32 to vector<8x128xf32>
    %7 = arith.maximumf %5, %6 : vector<8x128xf32>
    %c0_6 = arith.constant 0 : index
    %c0_7 = arith.constant 0 : index
    %8 = vector.load %arg3[%c0_6, %c0_7] : memref<128x128xf32, #tpu.memory_space<vmem>>, vector<128x128xf32>
    %cst_8 = arith.constant dense<0.000000e+00> : vector<8x128xf32>
    %9 = tpu.matmul %7, %8, %cst_8 {dimension_numbers = #tpu.dot_dimension_numbers<[1], [0], [0], [1], [0, 0, 1, 1], [], []>} : vector<8x128xf32>, vector<128x128xf32>, vector<8x128xf32> -> vector<8x128xf32>
    %c1 = arith.constant 1 : index
    %c0_9 = arith.constant 0 : index
    %10 = vector.load %arg6[%c1, %c0_9] : memref<4x128xf32, #tpu.memory_space<vmem>>, vector<1x128xf32>
    %11 = vector.broadcast %10 : vector<1x128xf32> to vector<8x128xf32>
    %12 = arith.addf %9, %11 : vector<8x128xf32>
    %cst_10 = arith.constant 0.000000e+00 : f32
    %13 = vector.broadcast %cst_10 : f32 to vector<8x128xf32>
    %14 = arith.maximumf %12, %13 : vector<8x128xf32>
    %c0_11 = arith.constant 0 : index
    %c0_12 = arith.constant 0 : index
    %15 = vector.load %arg4[%c0_11, %c0_12] : memref<128x128xf32, #tpu.memory_space<vmem>>, vector<128x128xf32>
    %cst_13 = arith.constant dense<0.000000e+00> : vector<8x128xf32>
    %16 = tpu.matmul %14, %15, %cst_13 {dimension_numbers = #tpu.dot_dimension_numbers<[1], [0], [0], [1], [0, 0, 1, 1], [], []>} : vector<8x128xf32>, vector<128x128xf32>, vector<8x128xf32> -> vector<8x128xf32>
    %c2 = arith.constant 2 : index
    %c0_14 = arith.constant 0 : index
    %17 = vector.load %arg6[%c2, %c0_14] : memref<4x128xf32, #tpu.memory_space<vmem>>, vector<1x128xf32>
    %18 = vector.broadcast %17 : vector<1x128xf32> to vector<8x128xf32>
    %19 = arith.addf %16, %18 : vector<8x128xf32>
    %cst_15 = arith.constant 0.000000e+00 : f32
    %20 = vector.broadcast %cst_15 : f32 to vector<8x128xf32>
    %21 = arith.maximumf %19, %20 : vector<8x128xf32>
    %c0_16 = arith.constant 0 : index
    %c0_17 = arith.constant 0 : index
    %22 = vector.load %arg5[%c0_16, %c0_17] : memref<128x128xf32, #tpu.memory_space<vmem>>, vector<128x128xf32>
    %cst_18 = arith.constant dense<0.000000e+00> : vector<8x128xf32>
    %23 = tpu.matmul %21, %22, %cst_18 {dimension_numbers = #tpu.dot_dimension_numbers<[1], [0], [0], [1], [0, 0, 1, 1], [], []>} : vector<8x128xf32>, vector<128x128xf32>, vector<8x128xf32> -> vector<8x128xf32>
    %c3 = arith.constant 3 : index
    %c0_19 = arith.constant 0 : index
    %24 = vector.load %arg6[%c3, %c0_19] : memref<4x128xf32, #tpu.memory_space<vmem>>, vector<1x128xf32>
    %25 = vector.broadcast %24 : vector<1x128xf32> to vector<8x128xf32>
    %26 = arith.addf %23, %25 : vector<8x128xf32>
    %c0_20 = arith.constant 0 : index
    %c0_21 = arith.constant 0 : index
    %27 = vector.load %arg7[%c0_20, %c0_21] : memref<8x128xf32, #tpu.memory_space<vmem>>, vector<8x128xf32>
    tpu.vector_store %arg7[%c0_20, %c0_21], %26 {strides = array<i32>} : memref<8x128xf32, #tpu.memory_space<vmem>>, vector<8x128xf32>,
    return
  }
  func.func @transform_0(%arg0: i32) -> (i32, i32) {
    %c0_i32 = arith.constant 0 : i32
    %c0_i32_0 = arith.constant 0 : i32
    return %arg0, %c0_i32 : i32, i32
  }
  func.func @transform_1(%arg0: i32) -> (i32, i32) {
    %c0_i32 = arith.constant 0 : i32
    %c0_i32_0 = arith.constant 0 : i32
    %c0_i32_1 = arith.constant 0 : i32
    return %c0_i32, %c0_i32_0 : i32, i32
  }
  func.func @transform_2(%arg0: i32) -> (i32, i32) {
    %c0_i32 = arith.constant 0 : i32
    %c0_i32_0 = arith.constant 0 : i32
    %c0_i32_1 = arith.constant 0 : i32
    return %c0_i32, %c0_i32_0 : i32, i32
  }
  func.func @transform_3(%arg0: i32) -> (i32, i32) {
    %c0_i32 = arith.constant 0 : i32
    %c0_i32_0 = arith.constant 0 : i32
    %c0_i32_1 = arith.constant 0 : i32
    return %c0_i32, %c0_i32_0 : i32, i32
  }
  func.func @transform_4(%arg0: i32) -> (i32, i32) {
    %c0_i32 = arith.constant 0 : i32
    %c0_i32_0 = arith.constant 0 : i32
    %c0_i32_1 = arith.constant 0 : i32
    return %c0_i32, %c0_i32_0 : i32, i32
  }
  func.func @transform_5(%arg0: i32) -> (i32, i32) {
    %c0_i32 = arith.constant 0 : i32
    %c0_i32_0 = arith.constant 0 : i32
    %c0_i32_1 = arith.constant 0 : i32
    return %c0_i32, %c0_i32_0 : i32, i32
  }
  func.func @transform_6(%arg0: i32) -> (i32, i32) {
    %c0_i32 = arith.constant 0 : i32
    %c0_i32_0 = arith.constant 0 : i32
    return %arg0, %c0_i32 : i32, i32
  }
}

</mosaic_0001>

<llo_original>
// kernel: more_layers_network_forward.1
$region0: #{more_layers_network_forward.1}
  #allocation0 [shape = 'u32[]', space=smem, size = 0x4, offset = 0x4, fixed_abs, tag = 'smem constant byte address 0x4 - core index']
  #allocation1 [shape = 'u32[144,128]{1,0:T(1,128)}', space=vmem, size = 0x12000, scoped, tag = 'internal scratch']
  %s0 = inlined_call_operand.hbm [shape: f32[8,32], index: 0, kind: input, shape index: {}]
  %s1 = inlined_call_operand.hbm [shape: f32[32,128], index: 1, kind: input, shape index: {}]
  %s2 = inlined_call_operand.hbm [shape: f32[128,128], index: 2, kind: input, shape index: {}]
  %s3 = inlined_call_operand.hbm [shape: f32[128,128], index: 3, kind: input, shape index: {}]
  %s4 = inlined_call_operand.hbm [shape: f32[128,128], index: 4, kind: input, shape index: {}]
  %s5 = inlined_call_operand.hbm [shape: f32[4,128], index: 5, kind: input, shape index: {}]
  %s6 = inlined_call_operand.hbm [shape: f32[8,128], index: 6, kind: output, shape index: {}]
  %s7 = sld [smem:[#allocation0]]
  $region58: #{more_layers_network_forward.1} parent=0
    _
  %s9 = ssub.s32 1, %s7
  %s10 = scalar_select 0, %s9, %s7
  $region1: #{more_layers_network_forward.1} parent=0
    #allocation2 [shape = 'u8[4096]{0}', space=vmem, size = 0x1000, scoped, tag = 'input window, operand 0, single buffered']
    #allocation3 [shape = 's32[1]{0}', space=sflag, size = 0x4, scoped, tag = 'scoped memory for more_layers_network_forward.1']
    #allocation4 [shape = 's32[1]{0}', space=sflag, size = 0x4, scoped, tag = 'scoped memory for more_layers_network_forward.1']
    #allocation5 [shape = 'u8[16384]{0}', space=vmem, size = 0x4000, scoped, tag = 'input window, operand 1, single buffered']
    #allocation6 [shape = 's32[1]{0}', space=sflag, size = 0x4, scoped, tag = 'scoped memory for more_layers_network_forward.1']
    #allocation7 [shape = 'u8[65536]{0}', space=vmem, size = 0x10000, scoped, tag = 'input window, operand 2, single buffered']
    #allocation8 [shape = 'u8[65536]{0}', space=vmem, size = 0x10000, scoped, tag = 'input window, operand 3, single buffered']
    #allocation9 [shape = 's32[1]{0}', space=sflag, size = 0x4, scoped, tag = 'scoped memory for more_layers_network_forward.1']
    #allocation10 [shape = 'u8[65536]{0}', space=vmem, size = 0x10000, scoped, tag = 'input window, operand 4, single buffered']
    #allocation11 [shape = 'u8[2048]{0}', space=vmem, size = 0x800, scoped, tag = 'input window, operand 5, single buffered']
    #allocation12 [shape = 's32[1]{0}', space=sflag, size = 0x4, scoped, tag = 'scoped memory for more_layers_network_forward.1']
    #allocation13 [shape = 'u8[4096]{0}', space=vmem, size = 0x1000, scoped, tag = 'output window, operand 0, single buffered']
    %11 = vsyncpa [#allocation3], 0
    %12 = vsyncpa [#allocation6], 0
    %13 = vsyncpa [#allocation9], 0
    %14 = vsyncpa [#allocation12], 0
    %15 = vsyncpa [#allocation4], 0
    // Predicated region
    $region2: #{more_layers_network_forward.1} parent=1 // pred_check
      _
    $region3: #{more_layers_network_forward.1} parent=1 // pred_check_branch
      %17 = sbr.rel (0) target = $region5
    $region4: #{more_layers_network_forward.1} parent=1 // pred_region
      %s19 = ssub.s32 128, 128
      %20 = vsyncadd [#allocation3], %s19
      %s22 = sshll.u32 [#allocation2], 4
      %s23 = int_to_ptr.vmem [resolvable:$true] %s22
      %25 = dma.hbm_to_vmem [thread:$0]  %s0, 128, %s23, [#allocation3]
    $region5: #{more_layers_network_forward.1} parent=1 // pred_fallthru
      _
    // Predicated region
    $region6: #{more_layers_network_forward.1} parent=1 // pred_check
      _
    $region7: #{more_layers_network_forward.1} parent=1 // pred_check_branch
      %27 = sbr.rel (0) target = $region9
    $region8: #{more_layers_network_forward.1} parent=1 // pred_region
      %s29 = ssub.s32 512, 512
      %30 = vsyncadd [#allocation6], %s29
      %s31 = sshll.u32 [#allocation5], 4
      %s32 = int_to_ptr.vmem [resolvable:$true] %s31
      %37 = dma.hbm_to_vmem [thread:$0]  %s1, 512, %s32, [#allocation6], 128, 128, 8
    $region9: #{more_layers_network_forward.1} parent=1 // pred_fallthru
      _
    // Predicated region
    $region10: #{more_layers_network_forward.1} parent=1 // pred_check
      _
    $region11: #{more_layers_network_forward.1} parent=1 // pred_check_branch
      %39 = sbr.rel (0) target = $region13
    $region12: #{more_layers_network_forward.1} parent=1 // pred_region
      %s41 = ssub.s32 2048, 2048
      %42 = vsyncadd [#allocation6], %s41
      %s43 = sshll.u32 [#allocation7], 4
      %s44 = int_to_ptr.vmem [resolvable:$true] %s43
      %49 = dma.hbm_to_vmem [thread:$0]  %s2, 2048, %s44, [#allocation6], 128, 128, 8
    $region13: #{more_layers_network_forward.1} parent=1 // pred_fallthru
      _
    // Predicated region
    $region14: #{more_layers_network_forward.1} parent=1 // pred_check
      _
    $region15: #{more_layers_network_forward.1} parent=1 // pred_check_branch
      %51 = sbr.rel (0) target = $region17
    $region16: #{more_layers_network_forward.1} parent=1 // pred_region
      %s53 = ssub.s32 2048, 2048
      %54 = vsyncadd [#allocation9], %s53
      %s55 = sshll.u32 [#allocation8], 4
      %s56 = int_to_ptr.vmem [resolvable:$true] %s55
      %61 = dma.hbm_to_vmem [thread:$0]  %s3, 2048, %s56, [#allocation9], 128, 128, 8
    $region17: #{more_layers_network_forward.1} parent=1 // pred_fallthru
      _
    // Predicated region
    $region18: #{more_layers_network_forward.1} parent=1 // pred_check
      _
    $region19: #{more_layers_network_forward.1} parent=1 // pred_check_branch
      %63 = sbr.rel (0) target = $region21
    $region20: #{more_layers_network_forward.1} parent=1 // pred_region
      %s65 = ssub.s32 2048, 2048
      %66 = vsyncadd [#allocation9], %s65
      %s67 = sshll.u32 [#allocation10], 4
      %s68 = int_to_ptr.vmem [resolvable:$true] %s67
      %73 = dma.hbm_to_vmem [thread:$0]  %s4, 2048, %s68, [#allocation9], 128, 128, 8
    $region21: #{more_layers_network_forward.1} parent=1 // pred_fallthru
      _
    // Predicated region
    $region22: #{more_layers_network_forward.1} parent=1 // pred_check
      _
    $region23: #{more_layers_network_forward.1} parent=1 // pred_check_branch
      %75 = sbr.rel (0) target = $region25
    $region24: #{more_layers_network_forward.1} parent=1 // pred_region
      %s77 = ssub.s32 64, 64
      %78 = vsyncadd [#allocation12], %s77
      %s80 = sshll.u32 [#allocation11], 4
      %s81 = int_to_ptr.vmem [resolvable:$true] %s80
      %83 = dma.hbm_to_vmem [thread:$0]  %s5, 64, %s81, [#allocation12]
    $region25: #{more_layers_network_forward.1} parent=1 // pred_fallthru
      _
    // Predicated region
    $region26: #{more_layers_network_forward.1} parent=1 // pred_check
      _
    $region27: #{more_layers_network_forward.1} parent=1 // pred_check_branch
      %85 = sbr.rel (0) target = $region29
    $region28: #{more_layers_network_forward.1} parent=1 // pred_region
      %86 = dma.done [#allocation3], 128
    $region29: #{more_layers_network_forward.1} parent=1 // pred_fallthru
      _
    // Predicated region
    $region30: #{more_layers_network_forward.1} parent=1 // pred_check
      _
    $region31: #{more_layers_network_forward.1} parent=1 // pred_check_branch
      %88 = sbr.rel (0) target = $region33
    $region32: #{more_layers_network_forward.1} parent=1 // pred_region
      %89 = dma.done [#allocation6], 512
    $region33: #{more_layers_network_forward.1} parent=1 // pred_fallthru
      _
    // Predicated region
    $region34: #{more_layers_network_forward.1} parent=1 // pred_check
      _
    $region35: #{more_layers_network_forward.1} parent=1 // pred_check_branch
      %91 = sbr.rel (0) target = $region37
    $region36: #{more_layers_network_forward.1} parent=1 // pred_region
      %92 = dma.done [#allocation6], 2048
    $region37: #{more_layers_network_forward.1} parent=1 // pred_fallthru
      _
    // Predicated region
    $region38: #{more_layers_network_forward.1} parent=1 // pred_check
      _
    $region39: #{more_layers_network_forward.1} parent=1 // pred_check_branch
      %94 = sbr.rel (0) target = $region41
    $region40: #{more_layers_network_forward.1} parent=1 // pred_region
      %95 = dma.done [#allocation9], 2048
    $region41: #{more_layers_network_forward.1} parent=1 // pred_fallthru
      _
    // Predicated region
    $region42: #{more_layers_network_forward.1} parent=1 // pred_check
      _
    $region43: #{more_layers_network_forward.1} parent=1 // pred_check_branch
      %97 = sbr.rel (0) target = $region45
    $region44: #{more_layers_network_forward.1} parent=1 // pred_region
      %98 = dma.done [#allocation9], 2048
    $region45: #{more_layers_network_forward.1} parent=1 // pred_fallthru
      _
    // Predicated region
    $region46: #{more_layers_network_forward.1} parent=1 // pred_check
      _
    $region47: #{more_layers_network_forward.1} parent=1 // pred_check_branch
      %100 = sbr.rel (0) target = $region49
    $region48: #{more_layers_network_forward.1} parent=1 // pred_region
      %101 = dma.done [#allocation12], 64
    $region49: #{more_layers_network_forward.1} parent=1 // pred_fallthru
      _
    %v102 = vld [vmem:[#allocation2] sm:$0xff]
    %v103 = vld [vmem:[#allocation5] sm:$0xff]
    %v104 = vld [vmem:[#allocation5 + $0x8] sm:$0xff]
    %v105 = vld [vmem:[#allocation5 + $0x10] sm:$0xff]
    %v106 = vld [vmem:[#allocation5 + $0x18] sm:$0xff]
    %v107 = vld [vmem:[#allocation11] sm:$0x1]
    %v108 = vlaneseq
    %v109 = vshrl.u32 %v108, 7
    %v110 = vsub.s32 0, %v109
    %v111 = vrot.slane %v107, %v110
    %vm112 = vcmask 261120
    %v114 = vsel %vm112, %v102, 0
    %116 = vmatprep.subr.mxu0 0.0
    %117 = vmatpush1.msra.mxu0 0.0
    %118 = vmatprep.subr.mxu0 0.0
    %119 = vmatpush1.msra.mxu0 0.0
    %120 = vmatprep.subr.mxu0 0.0
    %121 = vmatpush1.msra.mxu0 0.0
    %122 = vmatprep.subr.mxu0 0.0
    %123 = vmatpush1.msra.mxu0 0.0
    %124 = vmatprep.subr.mxu0 0.0
    %125 = vmatpush1.msra.mxu0 0.0
    %126 = vmatprep.subr.mxu0 0.0
    %127 = vmatpush1.msra.mxu0 0.0
    %128 = vmatprep.subr.mxu0 0.0
    %129 = vmatpush1.msra.mxu0 0.0
    %130 = vmatprep.subr.mxu0 0.0
    %131 = vmatpush1.msra.mxu0 0.0
    %132 = vmatprep.subr.mxu0 0.0
    %133 = vmatpush1.msra.mxu0 0.0
    %134 = vmatprep.subr.mxu0 0.0
    %135 = vmatpush1.msra.mxu0 0.0
    %136 = vmatprep.subr.mxu0 0.0
    %137 = vmatpush1.msra.mxu0 0.0
    %138 = vmatprep.subr.mxu0 0.0
    %139 = vmatpush1.msra.mxu0 0.0
    %140 = vmatprep.subr.mxu0 0.0
    %141 = vmatpush1.msra.mxu0 %v106
    %142 = vmatprep.subr.mxu0 0.0
    %143 = vmatpush1.msra.mxu0 %v105
    %144 = vmatprep.subr.mxu0 0.0
    %145 = vmatpush1.msra.mxu0 %v104
    %146 = vmatprep.subr.mxu0 0.0
    %147 = vmatpush1.msra.mxu0 %v103
    %148 = vmatprep.subr.mxu0 0.0
    %149 = vmatpush2.msra.mxu0 0.0
    %150 = vmatprep.subr.mxu0 0.0
    %151 = vmatpush2.msra.mxu0 0.0
    %152 = vmatprep.subr.mxu0 0.0
    %153 = vmatpush2.msra.mxu0 0.0
    %154 = vmatprep.subr.mxu0 0.0
    %155 = vmatpush2.msra.mxu0 0.0
    %156 = vmatprep.subr.mxu0 0.0
    %157 = vmatpush2.msra.mxu0 0.0
    %158 = vmatprep.subr.mxu0 0.0
    %159 = vmatpush2.msra.mxu0 0.0
    %160 = vmatprep.subr.mxu0 0.0
    %161 = vmatpush2.msra.mxu0 0.0
    %162 = vmatprep.subr.mxu0 0.0
    %163 = vmatpush2.msra.mxu0 0.0
    %164 = vmatprep.subr.mxu0 0.0
    %165 = vmatpush2.msra.mxu0 0.0
    %166 = vmatprep.subr.mxu0 0.0
    %167 = vmatpush2.msra.mxu0 0.0
    %168 = vmatprep.subr.mxu0 0.0
    %169 = vmatpush2.msra.mxu0 0.0
    %170 = vmatprep.subr.mxu0 0.0
    %171 = vmatpush2.msra.mxu0 0.0
    %172 = vmatprep.subr.mxu0 0.0
    %173 = vmatpush2.msra.mxu0 0.0
    %174 = vmatprep.subr.mxu0 0.0
    %175 = vmatpush2.msra.mxu0 0.0
    %176 = vmatprep.subr.mxu0 0.0
    %177 = vmatpush2.msra.mxu0 0.0
    %178 = vmatprep.subr.mxu0 0.0
    %179 = vmatpush2.msra.mxu0 0.0
    %180 = vmatprep.mubr.f32.mxu0 0.0
    %181 = vmatmul.mubr.f32.gmra.mxu0 %v114
    %v182 = vpop.f32.mrf.mxu0
    %v183 = vadd.f32 %v111, %v182
    %v184 = vpop.f32.mrf.mxu0
    %185 = vdwg.mxu0
    %v186 = vmax.f32 %v183, 0.0
    %v187 = vld [vmem:[#allocation7] sm:$0xff]
    %v188 = vld [vmem:[#allocation7 + $0x8] sm:$0xff]
    %v189 = vld [vmem:[#allocation7 + $0x10] sm:$0xff]
    %v190 = vld [vmem:[#allocation7 + $0x18] sm:$0xff]
    %v191 = vld [vmem:[#allocation7 + $0x20] sm:$0xff]
    %v192 = vld [vmem:[#allocation7 + $0x28] sm:$0xff]
    %v193 = vld [vmem:[#allocation7 + $0x30] sm:$0xff]
    %v194 = vld [vmem:[#allocation7 + $0x38] sm:$0xff]
    %v195 = vld [vmem:[#allocation7 + $0x40] sm:$0xff]
    %v196 = vld [vmem:[#allocation7 + $0x48] sm:$0xff]
    %v197 = vld [vmem:[#allocation7 + $0x50] sm:$0xff]
    %v198 = vld [vmem:[#allocation7 + $0x58] sm:$0xff]
    %v199 = vld [vmem:[#allocation7 + $0x60] sm:$0xff]
    %v200 = vld [vmem:[#allocation7 + $0x68] sm:$0xff]
    %v201 = vld [vmem:[#allocation7 + $0x70] sm:$0xff]
    %v202 = vld [vmem:[#allocation7 + $0x78] sm:$0xff]
    %v203 = vld [vmem:[#allocation11 + $0x1] sm:$0x1]
    %v204 = vlaneseq
    %v205 = vshrl.u32 %v204, 7
    %v206 = vsub.s32 0, %v205
    %v207 = vrot.slane %v203, %v206
    %208 = vmatprep.subr.mxu0 0.0
    %209 = vmatpush1.msra.mxu0 %v202
    %210 = vmatprep.subr.mxu0 0.0
    %211 = vmatpush1.msra.mxu0 %v201
    %212 = vmatprep.subr.mxu0 0.0
    %213 = vmatpush1.msra.mxu0 %v200
    %214 = vmatprep.subr.mxu0 0.0
    %215 = vmatpush1.msra.mxu0 %v199
    %216 = vmatprep.subr.mxu0 0.0
    %217 = vmatpush1.msra.mxu0 %v198
    %218 = vmatprep.subr.mxu0 0.0
    %219 = vmatpush1.msra.mxu0 %v197
    %220 = vmatprep.subr.mxu0 0.0
    %221 = vmatpush1.msra.mxu0 %v196
    %222 = vmatprep.subr.mxu0 0.0
    %223 = vmatpush1.msra.mxu0 %v195
    %224 = vmatprep.subr.mxu0 0.0
    %225 = vmatpush1.msra.mxu0 %v194
    %226 = vmatprep.subr.mxu0 0.0
    %227 = vmatpush1.msra.mxu0 %v193
    %228 = vmatprep.subr.mxu0 0.0
    %229 = vmatpush1.msra.mxu0 %v192
    %230 = vmatprep.subr.mxu0 0.0
    %231 = vmatpush1.msra.mxu0 %v191
    %232 = vmatprep.subr.mxu0 0.0
    %233 = vmatpush1.msra.mxu0 %v190
    %234 = vmatprep.subr.mxu0 0.0
    %235 = vmatpush1.msra.mxu0 %v189
    %236 = vmatprep.subr.mxu0 0.0
    %237 = vmatpush1.msra.mxu0 %v188
    %238 = vmatprep.subr.mxu0 0.0
    %239 = vmatpush1.msra.mxu0 %v187
    %240 = vmatprep.subr.mxu0 0.0
    %241 = vmatpush2.msra.mxu0 0.0
    %242 = vmatprep.subr.mxu0 0.0
    %243 = vmatpush2.msra.mxu0 0.0
    %244 = vmatprep.subr.mxu0 0.0
    %245 = vmatpush2.msra.mxu0 0.0
    %246 = vmatprep.subr.mxu0 0.0
    %247 = vmatpush2.msra.mxu0 0.0
    %248 = vmatprep.subr.mxu0 0.0
    %249 = vmatpush2.msra.mxu0 0.0
    %250 = vmatprep.subr.mxu0 0.0
    %251 = vmatpush2.msra.mxu0 0.0
    %252 = vmatprep.subr.mxu0 0.0
    %253 = vmatpush2.msra.mxu0 0.0
    %254 = vmatprep.subr.mxu0 0.0
    %255 = vmatpush2.msra.mxu0 0.0
    %256 = vmatprep.subr.mxu0 0.0
    %257 = vmatpush2.msra.mxu0 0.0
    %258 = vmatprep.subr.mxu0 0.0
    %259 = vmatpush2.msra.mxu0 0.0
    %260 = vmatprep.subr.mxu0 0.0
    %261 = vmatpush2.msra.mxu0 0.0
    %262 = vmatprep.subr.mxu0 0.0
    %263 = vmatpush2.msra.mxu0 0.0
    %264 = vmatprep.subr.mxu0 0.0
    %265 = vmatpush2.msra.mxu0 0.0
    %266 = vmatprep.subr.mxu0 0.0
    %267 = vmatpush2.msra.mxu0 0.0
    %268 = vmatprep.subr.mxu0 0.0
    %269 = vmatpush2.msra.mxu0 0.0
    %270 = vmatprep.subr.mxu0 0.0
    %271 = vmatpush2.msra.mxu0 0.0
    %272 = vmatprep.mubr.f32.mxu0 0.0
    %273 = vmatmul.mubr.f32.gmra.mxu0 %v186
    %v274 = vpop.f32.mrf.mxu0
    %v275 = vadd.f32 %v207, %v274
    %v276 = vpop.f32.mrf.mxu0
    %277 = vdwg.mxu0
    %v278 = vmax.f32 %v275, 0.0
    %v279 = vld [vmem:[#allocation8] sm:$0xff]
    %v280 = vld [vmem:[#allocation8 + $0x8] sm:$0xff]
    %v281 = vld [vmem:[#allocation8 + $0x10] sm:$0xff]
    %v282 = vld [vmem:[#allocation8 + $0x18] sm:$0xff]
    %v283 = vld [vmem:[#allocation8 + $0x20] sm:$0xff]
    %v284 = vld [vmem:[#allocation8 + $0x28] sm:$0xff]
    %v285 = vld [vmem:[#allocation8 + $0x30] sm:$0xff]
    %v286 = vld [vmem:[#allocation8 + $0x38] sm:$0xff]
    %v287 = vld [vmem:[#allocation8 + $0x40] sm:$0xff]
    %v288 = vld [vmem:[#allocation8 + $0x48] sm:$0xff]
    %v289 = vld [vmem:[#allocation8 + $0x50] sm:$0xff]
    %v290 = vld [vmem:[#allocation8 + $0x58] sm:$0xff]
    %v291 = vld [vmem:[#allocation8 + $0x60] sm:$0xff]
    %v292 = vld [vmem:[#allocation8 + $0x68] sm:$0xff]
    %v293 = vld [vmem:[#allocation8 + $0x70] sm:$0xff]
    %v294 = vld [vmem:[#allocation8 + $0x78] sm:$0xff]
    %v295 = vld [vmem:[#allocation11 + $0x2] sm:$0x1]
    %v296 = vlaneseq
    %v297 = vshrl.u32 %v296, 7
    %v298 = vsub.s32 0, %v297
    %v299 = vrot.slane %v295, %v298
    %300 = vmatprep.subr.mxu0 0.0
    %301 = vmatpush1.msra.mxu0 %v294
    %302 = vmatprep.subr.mxu0 0.0
    %303 = vmatpush1.msra.mxu0 %v293
    %304 = vmatprep.subr.mxu0 0.0
    %305 = vmatpush1.msra.mxu0 %v292
    %306 = vmatprep.subr.mxu0 0.0
    %307 = vmatpush1.msra.mxu0 %v291
    %308 = vmatprep.subr.mxu0 0.0
    %309 = vmatpush1.msra.mxu0 %v290
    %310 = vmatprep.subr.mxu0 0.0
    %311 = vmatpush1.msra.mxu0 %v289
    %312 = vmatprep.subr.mxu0 0.0
    %313 = vmatpush1.msra.mxu0 %v288
    %314 = vmatprep.subr.mxu0 0.0
    %315 = vmatpush1.msra.mxu0 %v287
    %316 = vmatprep.subr.mxu0 0.0
    %317 = vmatpush1.msra.mxu0 %v286
    %318 = vmatprep.subr.mxu0 0.0
    %319 = vmatpush1.msra.mxu0 %v285
    %320 = vmatprep.subr.mxu0 0.0
    %321 = vmatpush1.msra.mxu0 %v284
    %322 = vmatprep.subr.mxu0 0.0
    %323 = vmatpush1.msra.mxu0 %v283
    %324 = vmatprep.subr.mxu0 0.0
    %325 = vmatpush1.msra.mxu0 %v282
    %326 = vmatprep.subr.mxu0 0.0
    %327 = vmatpush1.msra.mxu0 %v281
    %328 = vmatprep.subr.mxu0 0.0
    %329 = vmatpush1.msra.mxu0 %v280
    %330 = vmatprep.subr.mxu0 0.0
    %331 = vmatpush1.msra.mxu0 %v279
    %332 = vmatprep.subr.mxu0 0.0
    %333 = vmatpush2.msra.mxu0 0.0
    %334 = vmatprep.subr.mxu0 0.0
    %335 = vmatpush2.msra.mxu0 0.0
    %336 = vmatprep.subr.mxu0 0.0
    %337 = vmatpush2.msra.mxu0 0.0
    %338 = vmatprep.subr.mxu0 0.0
    %339 = vmatpush2.msra.mxu0 0.0
    %340 = vmatprep.subr.mxu0 0.0
    %341 = vmatpush2.msra.mxu0 0.0
    %342 = vmatprep.subr.mxu0 0.0
    %343 = vmatpush2.msra.mxu0 0.0
    %344 = vmatprep.subr.mxu0 0.0
    %345 = vmatpush2.msra.mxu0 0.0
    %346 = vmatprep.subr.mxu0 0.0
    %347 = vmatpush2.msra.mxu0 0.0
    %348 = vmatprep.subr.mxu0 0.0
    %349 = vmatpush2.msra.mxu0 0.0
    %350 = vmatprep.subr.mxu0 0.0
    %351 = vmatpush2.msra.mxu0 0.0
    %352 = vmatprep.subr.mxu0 0.0
    %353 = vmatpush2.msra.mxu0 0.0
    %354 = vmatprep.subr.mxu0 0.0
    %355 = vmatpush2.msra.mxu0 0.0
    %356 = vmatprep.subr.mxu0 0.0
    %357 = vmatpush2.msra.mxu0 0.0
    %358 = vmatprep.subr.mxu0 0.0
    %359 = vmatpush2.msra.mxu0 0.0
    %360 = vmatprep.subr.mxu0 0.0
    %361 = vmatpush2.msra.mxu0 0.0
    %362 = vmatprep.subr.mxu0 0.0
    %363 = vmatpush2.msra.mxu0 0.0
    %364 = vmatprep.mubr.f32.mxu0 0.0
    %365 = vmatmul.mubr.f32.gmra.mxu0 %v278
    %v366 = vpop.f32.mrf.mxu0
    %v367 = vadd.f32 %v299, %v366
    %v368 = vpop.f32.mrf.mxu0
    %369 = vdwg.mxu0
    %v370 = vmax.f32 %v367, 0.0
    %v371 = vld [vmem:[#allocation10] sm:$0xff]
    %v372 = vld [vmem:[#allocation10 + $0x8] sm:$0xff]
    %v373 = vld [vmem:[#allocation10 + $0x10] sm:$0xff]
    %v374 = vld [vmem:[#allocation10 + $0x18] sm:$0xff]
    %v375 = vld [vmem:[#allocation10 + $0x20] sm:$0xff]
    %v376 = vld [vmem:[#allocation10 + $0x28] sm:$0xff]
    %v377 = vld [vmem:[#allocation10 + $0x30] sm:$0xff]
    %v378 = vld [vmem:[#allocation10 + $0x38] sm:$0xff]
    %v379 = vld [vmem:[#allocation10 + $0x40] sm:$0xff]
    %v380 = vld [vmem:[#allocation10 + $0x48] sm:$0xff]
    %v381 = vld [vmem:[#allocation10 + $0x50] sm:$0xff]
    %v382 = vld [vmem:[#allocation10 + $0x58] sm:$0xff]
    %v383 = vld [vmem:[#allocation10 + $0x60] sm:$0xff]
    %v384 = vld [vmem:[#allocation10 + $0x68] sm:$0xff]
    %v385 = vld [vmem:[#allocation10 + $0x70] sm:$0xff]
    %v386 = vld [vmem:[#allocation10 + $0x78] sm:$0xff]
    %v387 = vld [vmem:[#allocation11 + $0x3] sm:$0x1]
    %v388 = vlaneseq
    %v389 = vshrl.u32 %v388, 7
    %v390 = vsub.s32 0, %v389
    %v391 = vrot.slane %v387, %v390
    %392 = vmatprep.subr.mxu0 0.0
    %393 = vmatpush1.msra.mxu0 %v386
    %394 = vmatprep.subr.mxu0 0.0
    %395 = vmatpush1.msra.mxu0 %v385
    %396 = vmatprep.subr.mxu0 0.0
    %397 = vmatpush1.msra.mxu0 %v384
    %398 = vmatprep.subr.mxu0 0.0
    %399 = vmatpush1.msra.mxu0 %v383
    %400 = vmatprep.subr.mxu0 0.0
    %401 = vmatpush1.msra.mxu0 %v382
    %402 = vmatprep.subr.mxu0 0.0
    %403 = vmatpush1.msra.mxu0 %v381
    %404 = vmatprep.subr.mxu0 0.0
    %405 = vmatpush1.msra.mxu0 %v380
    %406 = vmatprep.subr.mxu0 0.0
    %407 = vmatpush1.msra.mxu0 %v379
    %408 = vmatprep.subr.mxu0 0.0
    %409 = vmatpush1.msra.mxu0 %v378
    %410 = vmatprep.subr.mxu0 0.0
    %411 = vmatpush1.msra.mxu0 %v377
    %412 = vmatprep.subr.mxu0 0.0
    %413 = vmatpush1.msra.mxu0 %v376
    %414 = vmatprep.subr.mxu0 0.0
    %415 = vmatpush1.msra.mxu0 %v375
    %416 = vmatprep.subr.mxu0 0.0
    %417 = vmatpush1.msra.mxu0 %v374
    %418 = vmatprep.subr.mxu0 0.0
    %419 = vmatpush1.msra.mxu0 %v373
    %420 = vmatprep.subr.mxu0 0.0
    %421 = vmatpush1.msra.mxu0 %v372
    %422 = vmatprep.subr.mxu0 0.0
    %423 = vmatpush1.msra.mxu0 %v371
    %424 = vmatprep.subr.mxu0 0.0
    %425 = vmatpush2.msra.mxu0 0.0
    %426 = vmatprep.subr.mxu0 0.0
    %427 = vmatpush2.msra.mxu0 0.0
    %428 = vmatprep.subr.mxu0 0.0
    %429 = vmatpush2.msra.mxu0 0.0
    %430 = vmatprep.subr.mxu0 0.0
    %431 = vmatpush2.msra.mxu0 0.0
    %432 = vmatprep.subr.mxu0 0.0
    %433 = vmatpush2.msra.mxu0 0.0
    %434 = vmatprep.subr.mxu0 0.0
    %435 = vmatpush2.msra.mxu0 0.0
    %436 = vmatprep.subr.mxu0 0.0
    %437 = vmatpush2.msra.mxu0 0.0
    %438 = vmatprep.subr.mxu0 0.0
    %439 = vmatpush2.msra.mxu0 0.0
    %440 = vmatprep.subr.mxu0 0.0
    %441 = vmatpush2.msra.mxu0 0.0
    %442 = vmatprep.subr.mxu0 0.0
    %443 = vmatpush2.msra.mxu0 0.0
    %444 = vmatprep.subr.mxu0 0.0
    %445 = vmatpush2.msra.mxu0 0.0
    %446 = vmatprep.subr.mxu0 0.0
    %447 = vmatpush2.msra.mxu0 0.0
    %448 = vmatprep.subr.mxu0 0.0
    %449 = vmatpush2.msra.mxu0 0.0
    %450 = vmatprep.subr.mxu0 0.0
    %451 = vmatpush2.msra.mxu0 0.0
    %452 = vmatprep.subr.mxu0 0.0
    %453 = vmatpush2.msra.mxu0 0.0
    %454 = vmatprep.subr.mxu0 0.0
    %455 = vmatpush2.msra.mxu0 0.0
    %456 = vmatprep.mubr.f32.mxu0 0.0
    %457 = vmatmul.mubr.f32.gmra.mxu0 %v370
    %v458 = vpop.f32.mrf.mxu0
    %v459 = vadd.f32 %v391, %v458
    %v460 = vpop.f32.mrf.mxu0
    %461 = vdwg.mxu0
    %462 = vst [vmem:[#allocation13] sm:$0xff] %v459
    // Predicated region
    $region50: #{more_layers_network_forward.1} parent=1 // pred_check
      _
    $region51: #{more_layers_network_forward.1} parent=1 // pred_check_branch
      %464 = sbr.rel (0) target = $region53
    $region52: #{more_layers_network_forward.1} parent=1 // pred_region
      %s466 = ssub.s32 128, 128
      %467 = vsyncadd [#allocation4], %s466
      %s469 = sshll.u32 [#allocation13], 4
      %s470 = int_to_ptr.vmem [resolvable:$true] %s469
      %472 = dma.vmem_to_hbm [thread:$0]  %s470, 128, %s6, [#allocation4]
    $region53: #{more_layers_network_forward.1} parent=1 // pred_fallthru
      _
    // Predicated region
    $region54: #{more_layers_network_forward.1} parent=1 // pred_check
      _
    $region55: #{more_layers_network_forward.1} parent=1 // pred_check_branch
      %474 = sbr.rel (0) target = $region57
    $region56: #{more_layers_network_forward.1} parent=1 // pred_region
      %475 = dma.done [#allocation4], 128
    $region57: #{more_layers_network_forward.1} parent=1 // pred_fallthru
      _
    %476 = vsyncpa [#allocation3], 1
    %477 = vsyncpa [#allocation6], 1
    %478 = vsyncpa [#allocation9], 1
    %479 = vsyncpa [#allocation12], 1
    %480 = vsyncpa [#allocation4], 1

</llo_original>
